<compile_context>
chip_gen: v7x
topology: tpu7x:2x2x1
jax: 0.10.0
libtpu: 0.0.40
codegen_flags: <defaults>
</compile_context>

<pallas_src>
import functools
import math

import jax
import jax.numpy as jnp
from jax import lax
from jax.experimental import pallas as pl
from jax.experimental.pallas import tpu as pltpu

PATCH = 8
NUM_HEADS = 16          # fixed in the PyTorch ViT.__init__
FF_MULT = 4
LN_EPS = 1e-5           # torch.nn.LayerNorm default
NEG_BIAS = -1e9         # mask value for padded key positions
_INV_SQRT2 = 1.0 / math.sqrt(2.0)


def _round_up(x, m):
    return (x + m - 1) // m * m


# -------------------- per-chip sizing (v7x: 64 MiB VMEM, v5e/v6e: 128 MiB) --
def _vmem_capacity_bytes():
    try:
        return int(pltpu.get_tpu_info().vmem_capacity_bytes)
    except Exception:
        return 64 * 1024 * 1024          # conservative: assume v7x


_VMEM_CAP = _vmem_capacity_bytes()
_BIG_VMEM = _VMEM_CAP > 96 * 1024 * 1024
VMEM_LIMIT_BYTES = min((_VMEM_CAP * 3) // 4, 100 * 1024 * 1024)  # ~48 MiB v7x / ~96 MiB v5e,v6e
TQ_TILE = 256 if _BIG_VMEM else 128       # query tile / sequence pad unit
LINEAR_TM = 1024 if _BIG_VMEM else 512    # row tile for the standalone linears


# ---------------- single-buffering of constant weight blocks ----------------
_const_kw_cache = None


def _const_kw():
    """kwargs that single-buffer constant (never-changing index) blocks."""
    global _const_kw_cache
    if _const_kw_cache is not None:
        return _const_kw_cache
    kw = {}
    if hasattr(pl, "Buffered"):
        try:
            probe_kw = {"pipeline_mode": pl.Buffered(1)}

            def _probe(a_ref, o_ref):
                o_ref[...] = a_ref[...]

            pl.pallas_call(
                _probe,
                out_shape=jax.ShapeDtypeStruct((8, 128), jnp.float32),
                grid=(1,),
                in_specs=[pl.BlockSpec((8, 128), lambda i: (0, 0), **probe_kw)],
                out_specs=pl.BlockSpec((8, 128), lambda i: (0, 0)),
            )(jnp.zeros((8, 128), jnp.float32)).block_until_ready()
            kw = probe_kw
        except Exception:
            kw = {}                       # fall back to default double-buffering
    _const_kw_cache = kw
    return kw


def _const_spec(shape, grid_rank):
    # constant index_map -> block fetched once (single-buffered if supported)
    nd = len(shape)
    if grid_rank == 1:
        idx = lambda i, _nd=nd: (0,) * _nd
    else:
        idx = lambda b, qi, _nd=nd: (0,) * _nd
    return pl.BlockSpec(shape, idx, **_const_kw())


# ----------------------------- kernel helpers -------------------------------
def _layernorm(x, g, b):
    # f32 statistics, biased variance -> matches torch.nn.LayerNorm.
    mu = jnp.mean(x, axis=-1, keepdims=True)
    var = jnp.mean((x - mu) ** 2, axis=-1, keepdims=True)
    return (x - mu) * lax.rsqrt(var + LN_EPS) * g + b


def _gelu_exact(x):
    # torch nn.GELU default: exact erf formulation (constant hoisted).
    return 0.5 * x * (1.0 + lax.erf(x * _INV_SQRT2))


# -------------------------------- kernels -----------------------------------
def linear_kernel(x_ref, w_ref, b_ref, o_ref):
    # bf16 MXU matmul, f32 accumulate + bias.
    o_ref[...] = (
        jnp.dot(x_ref[...].astype(jnp.bfloat16), w_ref[...],
                preferred_element_type=jnp.float32)
        + b_ref[...]
    )


def final_norm_kernel(x_ref, g_ref, b_ref, o_ref):
    o_ref[...] = _layernorm(x_ref[...], g_ref[...], b_ref[...])


def qkv_kernel(x_ref, ln1g_ref, ln1b_ref, wqkv_ref, q_ref, k_ref, v_ref,
               *, dim, scale):
    # One grid step == (one batch element, one row tile).
    xn = _layernorm(x_ref[0], ln1g_ref[...], ln1b_ref[...]).astype(jnp.bfloat16)
    qkv = jnp.dot(xn, wqkv_ref[...], preferred_element_type=jnp.float32)  # (TM, 3D)
    # attention scale folded into Q before the bf16 cast
    q_ref[0] = (qkv[:, :dim] * scale).astype(jnp.bfloat16)
    k_ref[0] = qkv[:, dim:2 * dim].astype(jnp.bfloat16)
    v_ref[0] = qkv[:, 2 * dim:].astype(jnp.bfloat16)


def attn_ffn_kernel(xq_ref, q_ref, k_ref, v_ref, bias_ref,
                    wout_ref, bout_ref, ln2g_ref, ln2b_ref,
                    w1_ref, bf1_ref, w2_ref, bf2_ref,
                    o_ref, *, num_heads, n_valid):
    # One grid step == (one batch element, one query tile).
    xq = xq_ref[0]                      # (TQ,   D) f32  residual stream
    q = q_ref[0]                        # (TQ,   D) bf16 (pre-scaled)
    k = k_ref[0]                        # (Npad, D) bf16
    v = v_ref[0]                        # (Npad, D) bf16
    tq, d = q.shape
    npad = k.shape[0]
    dh = d // num_heads

    # ---------------- attention (LN1 + QKV already hoisted) ----------------
    qh = q.reshape(tq, num_heads, dh).transpose(1, 0, 2)     # (H, TQ,   dh)
    kh = k.reshape(npad, num_heads, dh).transpose(1, 0, 2)   # (H, Npad, dh)
    vh = v.reshape(npad, num_heads, dh).transpose(1, 0, 2)   # (H, Npad, dh)

    s = jnp.einsum('hqd,hkd->hqk', qh, kh,
                   preferred_element_type=jnp.float32)        # (H, TQ, Npad)
    s = s + bias_ref[0].astype(jnp.float32)                   # rel-pos bias (bf16)
    if n_valid < npad:
        # key-padding mask generated in-kernel (bias itself is zero-padded)
        col = lax.broadcasted_iota(jnp.int32, (1, 1, npad), 2)
        s = s + jnp.where(col >= n_valid, NEG_BIAS, 0.0)
    s = s - jnp.max(s, axis=-1, keepdims=True)
    p = jnp.exp(s)
    p = p * pl.reciprocal(jnp.sum(p, axis=-1, keepdims=True), approx=True)
    # dropout(p=0.0) is an identity -> omitted

    ctx = jnp.einsum('hqk,hkd->hqd', p.astype(jnp.bfloat16), vh,
                     preferred_element_type=jnp.float32)      # (H, TQ, dh)
    ctx = ctx.transpose(1, 0, 2).reshape(tq, d).astype(jnp.bfloat16)  # (TQ, D)

    attn_out = (jnp.dot(ctx, wout_ref[...], preferred_element_type=jnp.float32)
                + bout_ref[...])
    x2 = xq + attn_out                  # residual after to_out (f32)

    # ------------------------------ FFN (pre-LN) ---------------------------
    xn2 = _layernorm(x2, ln2g_ref[...], ln2b_ref[...]).astype(jnp.bfloat16)
    hdn = (jnp.dot(xn2, w1_ref[...], preferred_element_type=jnp.float32)
           + bf1_ref[...])
    hdn = _gelu_exact(hdn).astype(jnp.bfloat16)
    y = (jnp.dot(hdn, w2_ref[...], preferred_element_type=jnp.float32)
         + bf2_ref[...])
    o_ref[0] = x2 + y                   # residual (f32)


# -------------------------------- wrappers ----------------------------------
def pallas_linear(x2d, w, b, tm=None):
    tm = LINEAR_TM if tm is None else tm
    m, kin = x2d.shape
    dout = w.shape[1]
    tm_eff = min(tm, _round_up(m, 8))
    m_pad = _round_up(m, tm_eff)
    if m_pad != m:
        x2d = jnp.pad(x2d, ((0, m_pad - m), (0, 0)))
    out = pl.pallas_call(
        linear_kernel,
        out_shape=jax.ShapeDtypeStruct((m_pad, dout), jnp.float32),
        grid=(m_pad // tm_eff,),
        in_specs=[
            pl.BlockSpec((tm_eff, kin), lambda i: (i, 0)),
            _const_spec((kin, dout), 1),
            _const_spec((1, dout), 1),
        ],
        out_specs=pl.BlockSpec((tm_eff, dout), lambda i: (i, 0)),
        compiler_params=pltpu.CompilerParams(
            dimension_semantics=("parallel",),
            vmem_limit_bytes=VMEM_LIMIT_BYTES),
    )(x2d, w, b)
    return out[:m]


def pallas_final_norm(x2d, g, b, tm=None):
    tm = LINEAR_TM if tm is None else tm
    m, d = x2d.shape
    tm_eff = min(tm, _round_up(m, 8))
    m_pad = _round_up(m, tm_eff)
    if m_pad != m:
        x2d = jnp.pad(x2d, ((0, m_pad - m), (0, 0)))
    out = pl.pallas_call(
        final_norm_kernel,
        out_shape=jax.ShapeDtypeStruct((m_pad, d), jnp.float32),
        grid=(m_pad // tm_eff,),
        in_specs=[
            pl.BlockSpec((tm_eff, d), lambda i: (i, 0)),
            _const_spec((1, d), 1),
            _const_spec((1, d), 1),
        ],
        out_specs=pl.BlockSpec((tm_eff, d), lambda i: (i, 0)),
        compiler_params=pltpu.CompilerParams(
            dimension_semantics=("parallel",),
            vmem_limit_bytes=VMEM_LIMIT_BYTES),
    )(x2d, g, b)
    return out[:m]


def qkv_project(x, p, *, tq):
    """Row-tiled LN1 + fused QKV projection: emits bf16 Q/K/V once per layer."""
    b_sz, npad, d = x.shape
    dh = d // NUM_HEADS
    kernel = functools.partial(qkv_kernel, dim=d, scale=dh ** -0.5)
    shp = jax.ShapeDtypeStruct((b_sz, npad, d), jnp.bfloat16)
    row_spec = pl.BlockSpec((1, tq, d), lambda b, i: (b, i, 0))
    return pl.pallas_call(
        kernel,
        out_shape=(shp, shp, shp),
        grid=(b_sz, npad // tq),
        in_specs=[
            row_spec,
            _const_spec((1, d), 2), _const_spec((1, d), 2),   # ln1 g/b
            _const_spec((d, 3 * d), 2),                       # fused wqkv
        ],
        out_specs=(row_spec, row_spec, row_spec),
        compiler_params=pltpu.CompilerParams(
            dimension_semantics=("parallel", "parallel"),
            vmem_limit_bytes=VMEM_LIMIT_BYTES),
    )(x, p["ln1_g"], p["ln1_b"], p["wqkv"])


def _layer_vmem_estimate(d, tq, npad, h):
    """Rough per-step VMEM footprint of the fused attention+FFN kernel."""
    bf2, f4 = 2, 4
    wbuf = 1 if _const_kw() else 2
    kv = 2 * npad * d * bf2 * 2                        # k, v (double-buffered)
    bias = h * tq * npad * bf2 * 2                     # bias tile
    xio = tq * d * f4 * 2 * 2                          # x tile in + out tile
    qin = tq * d * bf2 * 2                             # q tile
    weights = (d * d + 2 * d * FF_MULT * d) * bf2 * wbuf
    scores = h * tq * npad * f4 * 2                    # scores + exp intermediates
    hidden = tq * FF_MULT * d * f4                     # FFN hidden
    return kv + bias + xio + qin + weights + scores + hidden


def attn_ffn(x, q, k, v, bias, p, *, tq, n_valid):
    b_sz, npad, d = x.shape
    h = NUM_HEADS
    n_qt = npad // tq

    est = _layer_vmem_estimate(d, tq, npad, h)
    if est > VMEM_LIMIT_BYTES:
        raise ValueError(
            f"fused layer VMEM estimate {est >> 20} MiB exceeds limit "
            f"{VMEM_LIMIT_BYTES >> 20} MiB; reduce the query tile or dim")

    kernel = functools.partial(attn_ffn_kernel, num_heads=h, n_valid=n_valid)
    in_specs = [
        pl.BlockSpec((1, tq, d), lambda b, qi: (b, qi, 0)),           # x q-tile
        pl.BlockSpec((1, tq, d), lambda b, qi: (b, qi, 0)),           # q tile
        pl.BlockSpec((1, npad, d), lambda b, qi: (b, 0, 0)),          # k (full)
        pl.BlockSpec((1, npad, d), lambda b, qi: (b, 0, 0)),          # v (full)
        pl.BlockSpec((1, h, tq, npad), lambda b, qi: (b, 0, qi, 0)),  # bias tile
        _const_spec((d, d), 2), _const_spec((1, d), 2),               # wout bout
        _const_spec((1, d), 2), _const_spec((1, d), 2),               # ln2 g/b
        _const_spec((d, FF_MULT * d), 2), _const_spec((1, FF_MULT * d), 2),
        _const_spec((FF_MULT * d, d), 2), _const_spec((1, d), 2),
    ]
    return pl.pallas_call(
        kernel,
        out_shape=jax.ShapeDtypeStruct((b_sz, npad, d), jnp.float32),
        grid=(b_sz, n_qt),
        in_specs=in_specs,
        out_specs=pl.BlockSpec((1, tq, d), lambda b, qi: (b, qi, 0)),
        compiler_params=pltpu.CompilerParams(
            dimension_semantics=("parallel", "parallel"),
            vmem_limit_bytes=VMEM_LIMIT_BYTES),
    )(x, q, k, v, bias,
      p["wout"], p["bout"], p["ln2_g"], p["ln2_b"],
      p["w1"], p["b1"], p["w2"], p["b2"])


def patchify(imgs, ps):
    # 'b c (h i) (w j) -> b (h w) (c i j)'  (plain-JAX glue)
    b, c, hh, ww = imgs.shape
    h, w = hh // ps, ww // ps
    x = imgs.reshape(b, c, h, ps, w, ps)
    x = x.transpose(0, 2, 4, 1, 3, 5)           # b h w c i j
    return x.reshape(b, h * w, c * ps * ps)


def vit_forward(params, imgs, attn_bias, output_layers=None):
    b, c, hh, ww = imgs.shape
    x = patchify(imgs, PATCH)                   # (B, Np, C*ps*ps)
    n, pix = x.shape[1], x.shape[2]
    x = pallas_linear(x.reshape(b * n, pix), params["w_in"], params["b_in"])
    d = x.shape[-1]
    x = x.reshape(b, n, d)

    # Pad the sequence to a lane-dense multiple of the query tile; padded key
    # positions are masked in-kernel, padded query rows are sliced off.
    tq = min(TQ_TILE, _round_up(n, 128))
    npad = _round_up(n, tq)
    bias = attn_bias.astype(jnp.bfloat16)
    if npad != n:
        x = jnp.pad(x, ((0, 0), (0, npad - n), (0, 0)))
        bias = jnp.pad(bias, ((0, 0), (0, 0), (0, npad - n), (0, npad - n)))

    outputs = []
    for i, lp in enumerate(params["layers"]):
        qq, kk, vv = qkv_project(x, lp, tq=tq)
        x = attn_ffn(x, qq, kk, vv, bias, lp, tq=tq, n_valid=n)
        if output_layers is not None and i in output_layers:
            outputs.append(x[:, :n, :])

    if output_layers is None:
        xr = x[:, :n, :]
        xf = pallas_final_norm(xr.reshape(b * n, d),
                               params["ln_f_g"], params["ln_f_b"])
        return xf.reshape(b, n, d)
    outputs[-1] = pallas_final_norm(
        outputs[-1].reshape(b * n, d),
        params["ln_f_g"], params["ln_f_b"]).reshape(b, n, d)
    return outputs


# ----------------------------- parameter init -------------------------------
def init_params(key, dim, depth, in_channels):
    assert dim % NUM_HEADS == 0
    pix = PATCH * PATCH * in_channels
    keys = jax.random.split(key, 2 + depth)

    def w(k, shape, scale=0.02, dtype=jnp.bfloat16):
        return (scale * jax.random.normal(k, shape, jnp.float32)).astype(dtype)

    params = {
        "w_in": w(keys[0], (pix, dim)),                           # bf16
        "b_in": w(keys[1], (1, dim), dtype=jnp.float32),
        "ln_f_g": jnp.ones((1, dim), jnp.float32),
        "ln_f_b": jnp.zeros((1, dim), jnp.float32),
        "layers": [],
    }
    for i in range(depth):
        lk = jax.random.split(keys[2 + i], 7)
        params["layers"].append({
            "ln1_g": jnp.ones((1, dim), jnp.float32),
            "ln1_b": jnp.zeros((1, dim), jnp.float32),
            "wqkv": w(lk[0], (dim, 3 * dim)),                     # to_qkv (no bias)
            "wout": w(lk[1], (dim, dim)),                         # to_out
            "bout": w(lk[2], (1, dim), dtype=jnp.float32),
            "ln2_g": jnp.ones((1, dim), jnp.float32),
            "ln2_b": jnp.zeros((1, dim), jnp.float32),
            "w1": w(lk[3], (dim, FF_MULT * dim)),
            "b1": w(lk[4], (1, FF_MULT * dim), dtype=jnp.float32),
            "w2": w(lk[5], (FF_MULT * dim, dim)),
            "b2": w(lk[6], (1, dim), dtype=jnp.float32),
        })
    return params


# ---------------------------------- main -------------------------------------
if __name__ == "__main__":
    B, C, IMG = 2, 4, 16
    DIM, DEPTH = 64, 2                      # dim divisible by num_heads=16
    NP = (IMG // PATCH) ** 2                # 4 patches

    key = jax.random.PRNGKey(0)
    k_img, k_bias, k_par = jax.random.split(key, 3)
    imgs = jax.random.normal(k_img, (B, C, IMG, IMG), jnp.float32)
    attn_bias = 0.1 * jax.random.normal(k_bias, (B, NUM_HEADS, NP, NP), jnp.float32)
    params = init_params(k_par, DIM, DEPTH, C)

    out = vit_forward(params, imgs, attn_bias)
    out = jax.block_until_ready(out)
    assert out.shape == (B, NP, DIM) and out.dtype == jnp.float32
    assert bool(jnp.all(jnp.isfinite(out)))
    print("KERNEL_OK")
</pallas_src>

<mosaic_0001>
module attributes {stable_mosaic.version = 11 : i64} {
  func.func @_probe(%arg0: i32, %arg1: memref<8x128xf32, #tpu.memory_space<vmem>>, %arg2: memref<8x128xf32, #tpu.memory_space<vmem>>) attributes {dimension_semantics = [#tpu.dimension_semantics<arbitrary>], iteration_bounds = array<i64: 1>, scalar_prefetch = 0 : i64, scratch_operands = 0 : i64, tpu.core_type = #tpu.core_type<tc>, window_params = [{pipeline_mode = #tpu.pipeline_mode<synchronous>, transform_indices = @transform_0, window_bounds = array<i64: 8, 128>}, {pipeline_mode = #tpu.pipeline_mode<synchronous>, transform_indices = @transform_1, window_bounds = array<i64: 8, 128>}]} {
    %c0 = arith.constant 0 : index
    %c0_0 = arith.constant 0 : index
    %0 = vector.load %arg1[%c0, %c0_0] : memref<8x128xf32, #tpu.memory_space<vmem>>, vector<8x128xf32>
    %c0_1 = arith.constant 0 : index
    %c0_2 = arith.constant 0 : index
    %1 = vector.load %arg2[%c0_1, %c0_2] : memref<8x128xf32, #tpu.memory_space<vmem>>, vector<8x128xf32>
    tpu.vector_store %arg2[%c0_1, %c0_2], %0 {strides = array<i32>} : memref<8x128xf32, #tpu.memory_space<vmem>>, vector<8x128xf32>,
    return
  }
  func.func @transform_0(%arg0: i32) -> (i32, i32) {
    %c0_i32 = arith.constant 0 : i32
    %c0_i32_0 = arith.constant 0 : i32
    %c0_i32_1 = arith.constant 0 : i32
    return %c0_i32, %c0_i32_0 : i32, i32
  }
  func.func @transform_1(%arg0: i32) -> (i32, i32) {
    %c0_i32 = arith.constant 0 : i32
    %c0_i32_0 = arith.constant 0 : i32
    %c0_i32_1 = arith.constant 0 : i32
    return %c0_i32, %c0_i32_0 : i32, i32
  }
}

module attributes {stable_mosaic.version = 11 : i64} {
  func.func @linear_kernel(%arg0: i32, %arg1: memref<8x256xf32, #tpu.memory_space<vmem>>, %arg2: memref<256x64xbf16, #tpu.memory_space<vmem>>, %arg3: memref<1x64xf32, #tpu.memory_space<vmem>>, %arg4: memref<8x64xf32, #tpu.memory_space<vmem>>) attributes {dimension_semantics = [#tpu.dimension_semantics<parallel>], iteration_bounds = array<i64: 1>, scalar_prefetch = 0 : i64, scratch_operands = 0 : i64, tpu.core_type = #tpu.core_type<tc>, window_params = [{transform_indices = @transform_0, window_bounds = array<i64: 8, 256>}, {pipeline_mode = #tpu.pipeline_mode<synchronous>, transform_indices = @transform_1, window_bounds = array<i64: 256, 64>}, {pipeline_mode = #tpu.pipeline_mode<synchronous>, transform_indices = @transform_2, window_bounds = array<i64: 1, 64>}, {transform_indices = @transform_3, window_bounds = array<i64: 8, 64>}]} {
    %c0 = arith.constant 0 : index
    %c0_0 = arith.constant 0 : index
    %0 = vector.load %arg1[%c0, %c0_0] : memref<8x256xf32, #tpu.memory_space<vmem>>, vector<8x256xf32>
    %1 = arith.truncf %0 : vector<8x256xf32> to vector<8x256xbf16>
    %c0_1 = arith.constant 0 : index
    %c0_2 = arith.constant 0 : index
    %2 = vector.load %arg2[%c0_1, %c0_2] : memref<256x64xbf16, #tpu.memory_space<vmem>>, vector<256x64xbf16>
    %cst = arith.constant dense<0.000000e+00> : vector<8x64xf32>
    %3 = tpu.matmul %1, %2, %cst {dimension_numbers = #tpu.dot_dimension_numbers<[1], [0], [0], [1], [0, 0, 1, 1], [], []>} : vector<8x256xbf16>, vector<256x64xbf16>, vector<8x64xf32> -> vector<8x64xf32>
    %c0_3 = arith.constant 0 : index
    %c0_4 = arith.constant 0 : index
    %4 = vector.load %arg3[%c0_3, %c0_4] : memref<1x64xf32, #tpu.memory_space<vmem>>, vector<1x64xf32>
    %5 = vector.broadcast %4 : vector<1x64xf32> to vector<8x64xf32>
    %6 = arith.addf %3, %5 : vector<8x64xf32>
    %c0_5 = arith.constant 0 : index
    %c0_6 = arith.constant 0 : index
    %7 = vector.load %arg4[%c0_5, %c0_6] : memref<8x64xf32, #tpu.memory_space<vmem>>, vector<8x64xf32>
    tpu.vector_store %arg4[%c0_5, %c0_6], %6 {strides = array<i32>} : memref<8x64xf32, #tpu.memory_space<vmem>>, vector<8x64xf32>,
    return
  }
  func.func @transform_0(%arg0: i32) -> (i32, i32) {
    %c0_i32 = arith.constant 0 : i32
    %c0_i32_0 = arith.constant 0 : i32
    return %arg0, %c0_i32 : i32, i32
  }
  func.func @transform_1(%arg0: i32) -> (i32, i32) {
    %c0_i32 = arith.constant 0 : i32
    %c0_i32_0 = arith.constant 0 : i32
    %c0_i32_1 = arith.constant 0 : i32
    return %c0_i32, %c0_i32_0 : i32, i32
  }
  func.func @transform_2(%arg0: i32) -> (i32, i32) {
    %c0_i32 = arith.constant 0 : i32
    %c0_i32_0 = arith.constant 0 : i32
    %c0_i32_1 = arith.constant 0 : i32
    return %c0_i32, %c0_i32_0 : i32, i32
  }
  func.func @transform_3(%arg0: i32) -> (i32, i32) {
    %c0_i32 = arith.constant 0 : i32
    %c0_i32_0 = arith.constant 0 : i32
    return %arg0, %c0_i32 : i32, i32
  }
}

</mosaic_0001>

<llo_original>
// kernel: tpu_custom_call.1
$region0: #{tpu_custom_call.1}
  #allocation0 [shape = 'u32[]', space=smem, size = 0x4, offset = 0x4, fixed_abs, tag = 'smem constant byte address 0x4 - core index']
  #allocation1 [shape = 'u32[144,128]{1,0:T(1,128)}', space=vmem, size = 0x12000, scoped, tag = 'internal scratch']
  %s0 = inlined_call_operand.hbm [shape: f32[8,128], index: 0, kind: input, shape index: {}]
  %s1 = inlined_call_operand.hbm [shape: f32[8,128], index: 1, kind: output, shape index: {}]
  %s2 = sld [smem:[#allocation0]]
  $region18: #{tpu_custom_call.1} parent=0
    _
  %s4 = ssub.s32 1, %s2
  %s5 = scalar_select 0, %s4, %s2
  $region1: #{tpu_custom_call.1} parent=0
    #allocation2 [shape = 'u8[4096]{0}', space=vmem, size = 0x1000, scoped, tag = 'input window, operand 0, single buffered']
    #allocation3 [shape = 's32[1]{0}', space=sflag, size = 0x4, scoped, tag = 'scoped memory for tpu_custom_call.1']
    #allocation4 [shape = 's32[1]{0}', space=sflag, size = 0x4, scoped, tag = 'scoped memory for tpu_custom_call.1']
    #allocation5 [shape = 'u8[4096]{0}', space=vmem, size = 0x1000, scoped, tag = 'output window, operand 0, single buffered']
    %6 = vsyncpa [#allocation3], 0
    %7 = vsyncpa [#allocation4], 0
    // Predicated region
    $region2: #{tpu_custom_call.1} parent=1 // pred_check
      _
    $region3: #{tpu_custom_call.1} parent=1 // pred_check_branch
      %9 = sbr.rel (0) target = $region5
    $region4: #{tpu_custom_call.1} parent=1 // pred_region
      %s11 = ssub.s32 128, 128
      %12 = vsyncadd [#allocation3], %s11
      %s14 = sshll.u32 [#allocation2], 4
      %s15 = int_to_ptr.vmem [resolvable:$true] %s14
      %17 = dma.hbm_to_vmem [thread:$0]  %s0, 128, %s15, [#allocation3]
    $region5: #{tpu_custom_call.1} parent=1 // pred_fallthru
      _
    // Predicated region
    $region6: #{tpu_custom_call.1} parent=1 // pred_check
      _
    $region7: #{tpu_custom_call.1} parent=1 // pred_check_branch
      %19 = sbr.rel (0) target = $region9
    $region8: #{tpu_custom_call.1} parent=1 // pred_region
      %20 = dma.done [#allocation3], 128
    $region9: #{tpu_custom_call.1} parent=1 // pred_fallthru
      _
    %v21 = vld [vmem:[#allocation2] sm:$0xff]
    %22 = vst [vmem:[#allocation5] sm:$0xff] %v21
    // Predicated region
    $region10: #{tpu_custom_call.1} parent=1 // pred_check
      _
    $region11: #{tpu_custom_call.1} parent=1 // pred_check_branch
      %24 = sbr.rel (0) target = $region13
    $region12: #{tpu_custom_call.1} parent=1 // pred_region
      %s26 = ssub.s32 128, 128
      %27 = vsyncadd [#allocation4], %s26
      %s29 = sshll.u32 [#allocation5], 4
      %s30 = int_to_ptr.vmem [resolvable:$true] %s29
      %32 = dma.vmem_to_hbm [thread:$0]  %s30, 128, %s1, [#allocation4]
    $region13: #{tpu_custom_call.1} parent=1 // pred_fallthru
      _
    // Predicated region
    $region14: #{tpu_custom_call.1} parent=1 // pred_check
      _
    $region15: #{tpu_custom_call.1} parent=1 // pred_check_branch
      %34 = sbr.rel (0) target = $region17
    $region16: #{tpu_custom_call.1} parent=1 // pred_region
      %35 = dma.done [#allocation4], 128
    $region17: #{tpu_custom_call.1} parent=1 // pred_fallthru
      _
    %36 = vsyncpa [#allocation3], 1
    %37 = vsyncpa [#allocation4], 1

// kernel: tpu_custom_call.1
$region0: #{tpu_custom_call.1}
  #allocation0 [shape = 'u32[]', space=smem, size = 0x4, offset = 0x4, fixed_abs, tag = 'smem constant byte address 0x4 - core index']
  #allocation1 [shape = 'u32[144,128]{1,0:T(1,128)}', space=vmem, size = 0x12000, scoped, tag = 'internal scratch']
  %s0 = inlined_call_operand.vmem [shape: f32[8,256], index: 0, kind: input, shape index: {}]
  %s1 = inlined_call_operand.vmem [shape: bf16[256,64], index: 1, kind: input, shape index: {}]
  %s2 = inlined_call_operand.vmem [shape: f32[1,64], index: 2, kind: input, shape index: {}]
  %s3 = inlined_call_operand.hbm [shape: f32[8,64], index: 3, kind: output, shape index: {}]
  %s4 = sld [smem:[#allocation0]]
  $region22: #{tpu_custom_call.1} parent=0
    _
  %s6 = ssub.s32 1, %s4
  %s7 = scalar_select 0, %s6, %s4
  $region1: #{tpu_custom_call.1} parent=0
    #allocation2 [shape = 'u8[4096]{0}', space=vmem, size = 0x1000, scoped, tag = 'output window, operand 0, single buffered']
    #allocation3 [shape = 's32[1]{0}', space=sflag, size = 0x4, scoped, tag = 'scoped memory for tpu_custom_call.1']
    %8 = vsyncpa [#allocation3], 0
    // Predicated region
    $region2: #{tpu_custom_call.1} parent=1 // pred_check
      _
    $region3: #{tpu_custom_call.1} parent=1 // pred_check_branch
      %10 = sbr.rel (0) target = $region5
    $region4: #{tpu_custom_call.1} parent=1 // pred_region
      _
    $region5: #{tpu_custom_call.1} parent=1 // pred_fallthru
      _
    // Predicated region
    $region6: #{tpu_custom_call.1} parent=1 // pred_check
      _
    $region7: #{tpu_custom_call.1} parent=1 // pred_check_branch
      %12 = sbr.rel (0) target = $region9
    $region8: #{tpu_custom_call.1} parent=1 // pred_region
      _
    $region9: #{tpu_custom_call.1} parent=1 // pred_fallthru
      _
    // Predicated region
    $region10: #{tpu_custom_call.1} parent=1 // pred_check
      _
    $region11: #{tpu_custom_call.1} parent=1 // pred_check_branch
      %14 = sbr.rel (0) target = $region13
    $region12: #{tpu_custom_call.1} parent=1 // pred_region
      _
    $region13: #{tpu_custom_call.1} parent=1 // pred_fallthru
      _
    %v16 = vld [vmem:[%s0] sm:$0xff]
    %v17 = vld [vmem:[%s0 + $0x8] sm:$0xff]
    %v18 = vpack.c.bf16 %v16, %v16
    %v19 = vpack.c.bf16 %v17, %v17
    %v20 = vld [vmem:[%s1] sm:$0xf]
    %v21 = vld [vmem:[%s1 + $0x4] sm:$0xf]
    %v22 = vld [vmem:[%s1 + $0x8] sm:$0xf]
    %v23 = vld [vmem:[%s1 + $0xc] sm:$0xf]
    %v24 = vld [vmem:[%s1 + $0x10] sm:$0xf]
    %v25 = vld [vmem:[%s1 + $0x14] sm:$0xf]
    %v26 = vld [vmem:[%s1 + $0x18] sm:$0xf]
    %v27 = vld [vmem:[%s1 + $0x1c] sm:$0xf]
    %v28 = vld [vmem:[%s1 + $0x20] sm:$0xf]
    %v29 = vld [vmem:[%s1 + $0x24] sm:$0xf]
    %v30 = vld [vmem:[%s1 + $0x28] sm:$0xf]
    %v31 = vld [vmem:[%s1 + $0x2c] sm:$0xf]
    %v32 = vld [vmem:[%s1 + $0x30] sm:$0xf]
    %v33 = vld [vmem:[%s1 + $0x34] sm:$0xf]
    %v34 = vld [vmem:[%s1 + $0x38] sm:$0xf]
    %v35 = vld [vmem:[%s1 + $0x3c] sm:$0xf]
    %v36 = vld [vmem:[%s1 + $0x40] sm:$0xf]
    %v37 = vld [vmem:[%s1 + $0x44] sm:$0xf]
    %v38 = vld [vmem:[%s1 + $0x48] sm:$0xf]
    %v39 = vld [vmem:[%s1 + $0x4c] sm:$0xf]
    %v40 = vld [vmem:[%s1 + $0x50] sm:$0xf]
    %v41 = vld [vmem:[%s1 + $0x54] sm:$0xf]
    %v42 = vld [vmem:[%s1 + $0x58] sm:$0xf]
    %v43 = vld [vmem:[%s1 + $0x5c] sm:$0xf]
    %v44 = vld [vmem:[%s1 + $0x60] sm:$0xf]
    %v45 = vld [vmem:[%s1 + $0x64] sm:$0xf]
    %v46 = vld [vmem:[%s1 + $0x68] sm:$0xf]
    %v47 = vld [vmem:[%s1 + $0x6c] sm:$0xf]
    %v48 = vld [vmem:[%s1 + $0x70] sm:$0xf]
    %v49 = vld [vmem:[%s1 + $0x74] sm:$0xf]
    %v50 = vld [vmem:[%s1 + $0x78] sm:$0xf]
    %v51 = vld [vmem:[%s1 + $0x7c] sm:$0xf]
    %v52 = vld [vmem:[%s2] sm:$0x1]
    %v54 = vlaneseq
    %v55 = vshrl.u32 %v54, 7
    %v56 = vsub.s32 0, %v55
    %v57 = vrot.slane %v52, %v56
    %v91 = vunpack.c.l.b16 %v20
    %v92 = vunpack.c.l.b16 %v21
    %v93 = vunpack.c.l.b16 %v22
    %v94 = vunpack.c.l.b16 %v23
    %v95 = vunpack.c.l.b16 %v24
    %v96 = vunpack.c.l.b16 %v25
    %v97 = vunpack.c.l.b16 %v26
    %v98 = vunpack.c.l.b16 %v27
    %v99 = vunpack.c.l.b16 %v28
    %v100 = vunpack.c.l.b16 %v29
    %v101 = vunpack.c.l.b16 %v30
    %v102 = vunpack.c.l.b16 %v31
    %v103 = vunpack.c.l.b16 %v32
    %v104 = vunpack.c.l.b16 %v33
    %v105 = vunpack.c.l.b16 %v34
    %v106 = vunpack.c.l.b16 %v35
    %v107 = vunpack.c.l.b16 %v36
    %v108 = vunpack.c.l.b16 %v37
    %v109 = vunpack.c.l.b16 %v38
    %v110 = vunpack.c.l.b16 %v39
    %v111 = vunpack.c.l.b16 %v40
    %v112 = vunpack.c.l.b16 %v41
    %v113 = vunpack.c.l.b16 %v42
    %v114 = vunpack.c.l.b16 %v43
    %v115 = vunpack.c.l.b16 %v44
    %v116 = vunpack.c.l.b16 %v45
    %v117 = vunpack.c.l.b16 %v46
    %v118 = vunpack.c.l.b16 %v47
    %v119 = vunpack.c.l.b16 %v48
    %v120 = vunpack.c.l.b16 %v49
    %v121 = vunpack.c.l.b16 %v50
    %v122 = vunpack.c.l.b16 %v51
    %v123 = vpack.c.b16 %v92, %v91
    %v124 = vpack.c.b16 %v94, %v93
    %v125 = vpack.c.b16 %v96, %v95
    %v126 = vpack.c.b16 %v98, %v97
    %v127 = vpack.c.b16 %v100, %v99
    %v128 = vpack.c.b16 %v102, %v101
    %v129 = vpack.c.b16 %v104, %v103
    %v130 = vpack.c.b16 %v106, %v105
    %v131 = vpack.c.b16 %v108, %v107
    %v132 = vpack.c.b16 %v110, %v109
    %v133 = vpack.c.b16 %v112, %v111
    %v134 = vpack.c.b16 %v114, %v113
    %v135 = vpack.c.b16 %v116, %v115
    %v136 = vpack.c.b16 %v118, %v117
    %v137 = vpack.c.b16 %v120, %v119
    %v138 = vpack.c.b16 %v122, %v121
    %155 = vmatprep.subr.bf16.mxu0 0
    %156 = vmatpush1.bf16.msra.mxu0 %v123
    %157 = vmatprep.subr.bf16.mxu0 0
    %158 = vmatpush1.bf16.msra.mxu0 %v124
    %159 = vmatprep.subr.bf16.mxu0 0
    %160 = vmatpush1.bf16.msra.mxu0 %v125
    %161 = vmatprep.subr.bf16.mxu0 0
    %162 = vmatpush1.bf16.msra.mxu0 %v126
    %163 = vmatprep.subr.bf16.mxu0 0
    %164 = vmatpush1.bf16.msra.mxu0 %v127
    %165 = vmatprep.subr.bf16.mxu0 0
    %166 = vmatpush1.bf16.msra.mxu0 %v128
    %167 = vmatprep.subr.bf16.mxu0 0
    %168 = vmatpush1.bf16.msra.mxu0 %v129
    %169 = vmatprep.subr.bf16.mxu0 0
    %170 = vmatpush1.bf16.msra.mxu0 %v130
    %171 = vmatprep.subr.bf16.mxu0 0
    %172 = vmatpush1.bf16.msra.mxu0 %v131
    %173 = vmatprep.subr.bf16.mxu0 0
    %174 = vmatpush1.bf16.msra.mxu0 %v132
    %175 = vmatprep.subr.bf16.mxu0 0
    %176 = vmatpush1.bf16.msra.mxu0 %v133
    %177 = vmatprep.subr.bf16.mxu0 0
    %178 = vmatpush1.bf16.msra.mxu0 %v134
    %179 = vmatprep.subr.bf16.mxu0 0
    %180 = vmatpush1.bf16.msra.mxu0 %v135
    %181 = vmatprep.subr.bf16.mxu0 0
    %182 = vmatpush1.bf16.msra.mxu0 %v136
    %183 = vmatprep.subr.bf16.mxu0 0
    %184 = vmatpush1.bf16.msra.mxu0 %v137
    %185 = vmatprep.subr.bf16.mxu0 0
    %186 = vmatpush1.bf16.msra.mxu0 %v138
    %187 = vmatprep.mubr.bf16.mxu0 %v19
    %188 = vmatmul.mubr.bf16.gmra.mrb[0].mxu0 %v18
    %v189 = vpop.f32.mrb[0].mxu0
    %v190 = vadd.f32 %v57, %v189
    %v191 = vpop.f32.mrb[0].mxu0
    %v192 = vpop.f32.mrb[0].mxu0
    %v193 = vpop.f32.mrb[0].mxu0
    %194 = vdwg.mxu0
    %vm195 = vcmask 523264
    %196 = vst.msk [vmem:[#allocation2] sm:$0xff] %vm195, %v190
    // Predicated region
    $region14: #{tpu_custom_call.1} parent=1 // pred_check
      _
    $region15: #{tpu_custom_call.1} parent=1 // pred_check_branch
      %198 = sbr.rel (0) target = $region17
    $region16: #{tpu_custom_call.1} parent=1 // pred_region
      %s200 = ssub.s32 128, 128
      %201 = vsyncadd [#allocation3], %s200
      %s203 = sshll.u32 [#allocation2], 4
      %s204 = int_to_ptr.vmem [resolvable:$true] %s203
      %206 = dma.vmem_to_hbm [thread:$0]  %s204, 128, %s3, [#allocation3]
    $region17: #{tpu_custom_call.1} parent=1 // pred_fallthru
      _
    // Predicated region
    $region18: #{tpu_custom_call.1} parent=1 // pred_check
      _
    $region19: #{tpu_custom_call.1} parent=1 // pred_check_branch
      %208 = sbr.rel (0) target = $region21
    $region20: #{tpu_custom_call.1} parent=1 // pred_region
      %209 = dma.done [#allocation3], 128
    $region21: #{tpu_custom_call.1} parent=1 // pred_fallthru
      _
    %210 = vsyncpa [#allocation3], 1

</llo_original>
